<compile_context>
chip_gen: v7x
topology: tpu7x:2x2x1
jax: 0.10.0
libtpu: 0.0.40
codegen_flags: <defaults>
</compile_context>

<pallas_src>
import functools

import jax
import jax.numpy as jnp
from jax import lax
from jax.experimental import pallas as pl
from jax.experimental.pallas import tpu as pltpu


_PACK = 8  # original rows packed per lane-dense packed row (sublane factor)


def _round_up(n, m):
    return ((n + m - 1) // m) * m


def _cdiv(a, b):
    return (a + b - 1) // b


# ----------------------------- Pallas kernel --------------------------------
def _mvnn_kernel(xp_ref, w1b_ref, trilb_ref, selb_ref, o_ref):
    PH = trilb_ref.shape[0]          # P * H
    H = PH // _PACK
    # layer 1: block-diagonal W1  ->  8 independent x rows per packed row.
    z = jnp.dot(xp_ref[...], w1b_ref[...], preferred_element_type=jnp.float32)
    h1 = jnp.clip(z, 0.0, 1.0)                                   # bReLU_1
    # layer 2: W2 = tril(ones)  =>  per-group inclusive prefix sum, realised
    # as one block-diagonal tril matmul (the MXU is otherwise idle).
    cum = jnp.dot(h1, trilb_ref[...], preferred_element_type=jnp.float32)
    j = lax.broadcasted_iota(jnp.int32, (1, PH), 1)
    b2 = -((j % H).astype(jnp.float32))                          # -arange(H), tiled
    h2 = jnp.clip(cum + b2, 0.0, 1.0)                            # bReLU_1
    # output layer folded into an (P*H, P) selector: 8 outputs per packed row.
    o_ref[...] = jnp.dot(h2, selb_ref[...], preferred_element_type=jnp.float32)


# -------------------- packed structural weights (plain JAX glue) -------------
def _build_packed_weights(w1_t, wout_row, x_dtype):
    """Block-diagonal expansions of W1^T, tril(ones)^T and Wout for the packed
    (B/8, 8*D) layout."""
    D, H = w1_t.shape
    P = _PACK
    eyeP = jnp.eye(P, dtype=jnp.float32)
    # w1b[(p,d),(q,h)] = delta_pq * W1^T[d,h]                -> (P*D, P*H)
    w1b = jnp.einsum('pq,dh->pdqh', eyeP,
                     w1_t.astype(jnp.float32)).reshape(P * D, P * H).astype(x_dtype)
    # trilb[(p,i),(q,h)] = delta_pq * (i <= h)               -> (P*H, P*H)
    tri = (jnp.arange(H)[:, None] <= jnp.arange(H)[None, :]).astype(jnp.float32)
    trilb = jnp.einsum('pq,ih->piqh', eyeP, tri).reshape(P * H, P * H)
    # selb[(p,i), q]     = delta_pq * Wout[i]                -> (P*H, P)
    selb = jnp.einsum('pq,i->piq', eyeP,
                      wout_row.reshape(-1).astype(jnp.float32)).reshape(P * H, P)
    return w1b, trilb, selb


# ------------------------------ host wrapper ---------------------------------
def explicit_100_ub_mvnn_forward(x, w1_t, wout_row, *, tile_rows=65536):
    """x: (B, D) in f32/bf16 (bf16 is exact for binary bundles).
    w1_t: (D, H) f32.  wout_row: (1, H) f32.  Returns (B, 1) f32."""
    B, D = x.shape
    H = w1_t.shape[1]
    P = _PACK

    # Stream x in a narrow dtype when possible (bit-exact for binary bundles).
    # v7x MXU has no int path, so non-float inputs are upcast to bf16.
    if x.dtype not in (jnp.float32, jnp.bfloat16):
        x = x.astype(jnp.bfloat16)
    x_dtype = x.dtype

    # ---- lane-dense repack: (B, D) -> (Bp, P*D); free row-major reshape. ----
    Bp = _cdiv(B, P)                                   # packed rows
    if Bp * P != B:
        x = jnp.pad(x, ((0, Bp * P - B), (0, 0)))      # zero rows -> zero output
    xp = x.reshape(Bp, P * D)

    # ---- tile sizing (packed rows): large tiles, multiple of 8, >=2 tiles ---
    TMp = max(8, min(tile_rows // P, _round_up(Bp, 8)))
    TMp = _round_up(TMp, 8)
    if Bp > 8 and TMp >= _round_up(Bp, 8):
        TMp = _round_up(_cdiv(Bp, 2), 8)               # keep both v7x TCs busy
    Bp_pad = _round_up(Bp, TMp)
    if Bp_pad != Bp:
        xp = jnp.pad(xp, ((0, Bp_pad - Bp), (0, 0)))
    G = Bp_pad // TMp

    w1b, trilb, selb = _build_packed_weights(w1_t, wout_row, x_dtype)

    rows = Bp_pad * P
    x_bytes = Bp_pad * P * D * jnp.dtype(x_dtype).itemsize
    w_bytes = (P * D * P * H * jnp.dtype(x_dtype).itemsize
               + P * H * P * H * 4 + P * H * P * 4)
    cost = pl.CostEstimate(
        flops=int(rows * (2 * D * H + 2 * H * H + 6 * H)),
        transcendentals=0,
        bytes_accessed=int(x_bytes + w_bytes + rows * 4),
    )

    out = pl.pallas_call(
        _mvnn_kernel,
        out_shape=jax.ShapeDtypeStruct((Bp_pad, P), jnp.float32),
        grid=(G,),
        in_specs=[
            pl.BlockSpec((TMp, P * D), lambda i: (i, 0)),    # streamed x tiles
            pl.BlockSpec((P * D, P * H), lambda i: (0, 0)),  # VMEM-resident
            pl.BlockSpec((P * H, P * H), lambda i: (0, 0)),  # VMEM-resident
            pl.BlockSpec((P * H, P), lambda i: (0, 0)),      # VMEM-resident
        ],
        out_specs=pl.BlockSpec((TMp, P), lambda i: (i, 0)),  # lane-dense packed out
        compiler_params=pltpu.CompilerParams(
            dimension_semantics=("parallel",),
            vmem_limit_bytes=48 * 1024 * 1024,
        ),
        cost_estimate=cost,
    )(xp, w1b, trilb, selb)

    # (Bp_pad, P) -> (Bp_pad*P, 1) is a free row-major reshape; drop padding.
    return out.reshape(Bp_pad * P, 1)[:B]
    # TODO(synk): optional pl.Buffered(3) on the x BlockSpec if profiling shows
    # exposed DMA gaps between grid steps (compute per tile is ~0).


# --------------------- parameter construction (glue, plain JAX) --------------
def build_params(X_train, y_train):
    """Replicates Explicit100UpperBoundMVNN._set_weights deterministically.

    Only W1^T and Wout are needed: b1 == 0, W2 and b2 are structural and are
    reproduced inside the kernel (block-diag tril matmul + in-kernel iota)."""
    idx = jnp.argsort(y_train)                      # torch.sort(y_train)
    y = y_train[idx]
    X = X_train[idx][:-1]                           # drop row with largest y
    W1 = (1.0 - X).astype(jnp.float32)              # (H, D)
    Wout = (y[1:] - y[:-1]).astype(jnp.float32).reshape(1, -1)   # (1, H)
    return W1.T, Wout                               # (D, H), (1, H)


def ref_forward(x, w1_t, wout_row):
    """Plain-JAX reference using the ORIGINAL module math (dense W2, b2)."""
    H = w1_t.shape[1]
    h1 = jnp.clip(x @ w1_t, 0.0, 1.0)                            # b1 == 0
    W2T = jnp.tril(jnp.ones((H, H), jnp.float32)).T
    b2 = -jnp.arange(H, dtype=jnp.float32)
    h2 = jnp.clip(h1 @ W2T + b2, 0.0, 1.0)
    return h2 @ wout_row.T


# ---------------------------------- main -------------------------------------
if __name__ == "__main__":
    key = jax.random.PRNGKey(0)
    k_x, k_bundles, k_y = jax.random.split(key, 3)

    input_dim = 16
    target_max = 10.0
    n_random = 7                                    # ntrain = 9 -> hidden H = 8
    batch = 150                                     # exercises row pad, packed pad, G=2

    # Training data: contains full bundle (1..1) and empty bundle (0..0), as the
    # module's _set_training_data requires / enforces.
    full_bundle = jnp.ones((1, input_dim), jnp.float32)
    empty_bundle = jnp.zeros((1, input_dim), jnp.float32)
    rnd_bundles = jax.random.bernoulli(
        k_bundles, 0.5, (n_random, input_dim)).astype(jnp.float32)
    X_train = jnp.concatenate([full_bundle, empty_bundle, rnd_bundles], axis=0)

    y_rand = jax.random.uniform(k_y, (n_random,), jnp.float32,
                                minval=0.5, maxval=target_max - 0.5)
    y_train = jnp.concatenate(
        [jnp.array([target_max], jnp.float32),      # value of the full bundle
         jnp.array([0.0], jnp.float32),             # value of the empty bundle
         y_rand])

    w1_t, wout_row = build_params(X_train, y_train)

    # Query bundles (binary) streamed in bf16: bit-exact and half the HBM bytes.
    x_bits = jax.random.bernoulli(k_x, 0.5, (batch, input_dim))
    x = x_bits.astype(jnp.bfloat16)

    out = explicit_100_ub_mvnn_forward(x, w1_t, wout_row)
    out = jax.block_until_ready(out)

    expected = ref_forward(x_bits.astype(jnp.float32), w1_t, wout_row)
    assert out.shape == (batch, 1)
    assert jnp.allclose(out, expected, atol=1e-5, rtol=1e-5)

    print("KERNEL_OK")
</pallas_src>

<mosaic_0001>
module attributes {stable_mosaic.version = 11 : i64} {
  func.func @_mvnn_kernel(%arg0: i32, %arg1: memref<16x128xbf16, #tpu.memory_space<vmem>>, %arg2: memref<128x64xbf16, #tpu.memory_space<vmem>>, %arg3: memref<64x64xf32, #tpu.memory_space<vmem>>, %arg4: memref<64x8xf32, #tpu.memory_space<vmem>>, %arg5: memref<16x8xf32, #tpu.memory_space<vmem>>) attributes {dimension_semantics = [#tpu.dimension_semantics<parallel>], iteration_bounds = array<i64: 2>, scalar_prefetch = 0 : i64, scratch_operands = 0 : i64, tpu.core_type = #tpu.core_type<tc>, window_params = [{transform_indices = @transform_0, window_bounds = array<i64: 16, 128>}, {pipeline_mode = #tpu.pipeline_mode<synchronous>, transform_indices = @transform_1, window_bounds = array<i64: 128, 64>}, {pipeline_mode = #tpu.pipeline_mode<synchronous>, transform_indices = @transform_2, window_bounds = array<i64: 64, 64>}, {pipeline_mode = #tpu.pipeline_mode<synchronous>, transform_indices = @transform_3, window_bounds = array<i64: 64, 8>}, {transform_indices = @transform_4, window_bounds = array<i64: 16, 8>}]} {
    %c0 = arith.constant 0 : index
    %c0_0 = arith.constant 0 : index
    %0 = vector.load %arg1[%c0, %c0_0] : memref<16x128xbf16, #tpu.memory_space<vmem>>, vector<16x128xbf16>
    %c0_1 = arith.constant 0 : index
    %c0_2 = arith.constant 0 : index
    %1 = vector.load %arg2[%c0_1, %c0_2] : memref<128x64xbf16, #tpu.memory_space<vmem>>, vector<128x64xbf16>
    %cst = arith.constant dense<0.000000e+00> : vector<16x64xf32>
    %2 = tpu.matmul %0, %1, %cst {dimension_numbers = #tpu.dot_dimension_numbers<[1], [0], [0], [1], [0, 0, 1, 1], [], []>} : vector<16x128xbf16>, vector<128x64xbf16>, vector<16x64xf32> -> vector<16x64xf32>
    %cst_3 = arith.constant 0.000000e+00 : f32
    %cst_4 = arith.constant 1.000000e+00 : f32
    %3 = vector.broadcast %cst_3 : f32 to vector<16x64xf32>
    %4 = arith.maximumf %3, %2 : vector<16x64xf32>
    %5 = vector.broadcast %cst_4 : f32 to vector<16x64xf32>
    %6 = arith.minimumf %5, %4 : vector<16x64xf32>
    %c0_5 = arith.constant 0 : index
    %c0_6 = arith.constant 0 : index
    %7 = vector.load %arg3[%c0_5, %c0_6] : memref<64x64xf32, #tpu.memory_space<vmem>>, vector<64x64xf32>
    %cst_7 = arith.constant dense<0.000000e+00> : vector<16x64xf32>
    %8 = tpu.matmul %6, %7, %cst_7 {dimension_numbers = #tpu.dot_dimension_numbers<[1], [0], [0], [1], [0, 0, 1, 1], [], []>} : vector<16x64xf32>, vector<64x64xf32>, vector<16x64xf32> -> vector<16x64xf32>
    %9 = tpu.iota {dimensions = array<i32: 1>} : vector<1x64xi32>
    %c8_i32 = arith.constant 8 : i32
    %c0_i32 = arith.constant 0 : i32
    %10 = arith.cmpi eq, %c8_i32, %c0_i32 : i32
    %c1_i32 = arith.constant 1 : i32
    %11 = arith.select %10, %c1_i32, %c8_i32 : i32
    %12 = vector.broadcast %11 : i32 to vector<1x64xi32>
    %13 = arith.remsi %9, %12 : vector<1x64xi32>
    %c0_i32_8 = arith.constant 0 : i32
    %14 = vector.broadcast %c0_i32_8 : i32 to vector<1x64xi32>
    %15 = arith.cmpi ne, %13, %14 : vector<1x64xi32>
    %c0_i32_9 = arith.constant 0 : i32
    %16 = vector.broadcast %c0_i32_9 : i32 to vector<1x64xi32>
    %17 = arith.cmpi slt, %13, %16 : vector<1x64xi32>
    %c0_i32_10 = arith.constant 0 : i32
    %18 = arith.cmpi slt, %11, %c0_i32_10 : i32
    %19 = vector.broadcast %18 : i1 to vector<1x64xi1>
    %20 = vector.broadcast %19 : vector<1x64xi1> to vector<1x64xi1>
    %21 = arith.xori %17, %20 : vector<1x64xi1>
    %22 = arith.andi %21, %15 : vector<1x64xi1>
    %23 = vector.broadcast %11 : i32 to vector<1x64xi32>
    %24 = arith.addi %13, %23 : vector<1x64xi32>
    %25 = arith.select %22, %24, %13 : vector<1x64xi1>, vector<1x64xi32>
    %26 = arith.sitofp %25 : vector<1x64xi32> to vector<1x64xf32>
    %cst_11 = arith.constant 0.000000e+00 : f32
    %27 = vector.broadcast %cst_11 : f32 to vector<1x64xf32>
    %28 = arith.subf %27, %26 : vector<1x64xf32>
    %29 = vector.broadcast %28 : vector<1x64xf32> to vector<16x64xf32>
    %30 = arith.addf %8, %29 : vector<16x64xf32>
    %cst_12 = arith.constant 0.000000e+00 : f32
    %cst_13 = arith.constant 1.000000e+00 : f32
    %31 = vector.broadcast %cst_12 : f32 to vector<16x64xf32>
    %32 = arith.maximumf %31, %30 : vector<16x64xf32>
    %33 = vector.broadcast %cst_13 : f32 to vector<16x64xf32>
    %34 = arith.minimumf %33, %32 : vector<16x64xf32>
    %c0_14 = arith.constant 0 : index
    %c0_15 = arith.constant 0 : index
    %35 = vector.load %arg4[%c0_14, %c0_15] : memref<64x8xf32, #tpu.memory_space<vmem>>, vector<64x8xf32>
    %cst_16 = arith.constant dense<0.000000e+00> : vector<16x8xf32>
    %36 = tpu.matmul %34, %35, %cst_16 {dimension_numbers = #tpu.dot_dimension_numbers<[1], [0], [0], [1], [0, 0, 1, 1], [], []>} : vector<16x64xf32>, vector<64x8xf32>, vector<16x8xf32> -> vector<16x8xf32>
    %c0_17 = arith.constant 0 : index
    %c0_18 = arith.constant 0 : index
    %37 = vector.load %arg5[%c0_17, %c0_18] : memref<16x8xf32, #tpu.memory_space<vmem>>, vector<16x8xf32>
    tpu.vector_store %arg5[%c0_17, %c0_18], %36 {strides = array<i32>} : memref<16x8xf32, #tpu.memory_space<vmem>>, vector<16x8xf32>,
    return
  }
  func.func @transform_0(%arg0: i32) -> (i32, i32) {
    %c0_i32 = arith.constant 0 : i32
    %c0_i32_0 = arith.constant 0 : i32
    return %arg0, %c0_i32 : i32, i32
  }
  func.func @transform_1(%arg0: i32) -> (i32, i32) {
    %c0_i32 = arith.constant 0 : i32
    %c0_i32_0 = arith.constant 0 : i32
    %c0_i32_1 = arith.constant 0 : i32
    return %c0_i32, %c0_i32_0 : i32, i32
  }
  func.func @transform_2(%arg0: i32) -> (i32, i32) {
    %c0_i32 = arith.constant 0 : i32
    %c0_i32_0 = arith.constant 0 : i32
    %c0_i32_1 = arith.constant 0 : i32
    return %c0_i32, %c0_i32_0 : i32, i32
  }
  func.func @transform_3(%arg0: i32) -> (i32, i32) {
    %c0_i32 = arith.constant 0 : i32
    %c0_i32_0 = arith.constant 0 : i32
    %c0_i32_1 = arith.constant 0 : i32
    return %c0_i32, %c0_i32_0 : i32, i32
  }
  func.func @transform_4(%arg0: i32) -> (i32, i32) {
    %c0_i32 = arith.constant 0 : i32
    %c0_i32_0 = arith.constant 0 : i32
    return %arg0, %c0_i32 : i32, i32
  }
}

</mosaic_0001>

<llo_original>
// kernel: tpu_custom_call.1
$region0: #{tpu_custom_call.1}
  #allocation0 [shape = 'u32[]', space=smem, size = 0x4, offset = 0x4, fixed_abs, tag = 'smem constant byte address 0x4 - core index']
  #allocation1 [shape = 'u32[144,128]{1,0:T(1,128)}', space=vmem, size = 0x12000, scoped, tag = 'internal scratch']
  %s0 = inlined_call_operand.vmem [shape: bf16[32,128], index: 0, kind: input, shape index: {}]
  %s1 = inlined_call_operand.vmem [shape: bf16[128,64], index: 1, kind: input, shape index: {}]
  %s2 = inlined_call_operand.vmem [shape: f32[64,64], index: 2, kind: input, shape index: {}]
  %s3 = inlined_call_operand.vmem [shape: f32[64,8], index: 3, kind: input, shape index: {}]
  %s4 = inlined_call_operand.vmem [shape: f32[32,8], index: 4, kind: output, shape index: {}]
  %s5 = sld [smem:[#allocation0]]
  $region49: #{tpu_custom_call.1} parent=0
    _
  %s7 = ssub.s32 1, %s5
  %s8 = scalar_select 0, %s7, %s5
  loop: start=0, step=1, limit=4
  $region2: #{tpu_custom_call.1} parent=0 // loop_pre_header
    _
  $region3: #{tpu_custom_call.1} parent=0 // loop_header
    %s10 = sphi 0, %s14
    %p11 = scmp.ge.s32.totalorder %s10, 4
    %s20 = sphi 0, %s22
    %s23 = sphi 0, %s20
    %s24 = sphi 0, %s23
    %s40 = sphi 0, %s24
    %s44 = sphi 0, %s44
    %s46 = sphi 0, %s44
    %s47 = sphi 0, %s46
    %s61 = sphi 0, %s47
    %s65 = sphi 0, %s65
    %s67 = sphi 0, %s65
    %s68 = sphi 0, %s67
    %s82 = sphi 0, %s68
    %s86 = sphi 0, %s86
    %s88 = sphi 0, %s86
    %s89 = sphi 0, %s88
    %s103 = sphi 0, %s89
    %s109 = sphi 0, %s111
    %s112 = sphi 0, %s109
    %s113 = sphi 0, %s112
    %s129 = sphi 0, %s113
  $region4: #{tpu_custom_call.1} parent=0 // loop_header_branch
    %13 = sbr.rel (%p11) target = $region8
  $region5: #{tpu_custom_call.1} parent=0 // loop_body
    %s15 = ssub.s32 %s10, 1
    %s16 = ssub.s32 %s10, 2
    %s17 = sadd.s32 %s10, 1
    %s18 = ssub.s32 %s10, %s17
    %p19 = scmp.eq.s32.totalorder %s18, 0
    %s21 = sadd.s32 %s20, 1
    %s22 = scalar_select %p19, %s20, %s21
    %p25 = pneg %p19
    %p26 = scmp.eq.s32.totalorder %s10, 1
    %p27 = por %p25, %p26
    %p28 = scmp.ne.s32.totalorder %s20, %s23
    %p29 = scmp.eq.s32.totalorder %s10, 0
    %p30 = por %p28, %p29
    %p31 = scmp.ne.s32.totalorder %s20, %s23
    %p32 = scmp.eq.s32.totalorder %s15, 1
    %p33 = por %p31, %p32
    %p34 = scmp.ne.s32.totalorder %s23, %s24
    %p35 = scmp.eq.s32.totalorder %s15, 0
    %p36 = por %p34, %p35
    %p37 = scmp.ne.s32.totalorder %s23, %s24
    %p38 = scmp.eq.s32.totalorder %s16, 1
    %p39 = por %p37, %p38
    %p41 = scmp.ne.s32.totalorder %s24, %s40
    %p42 = scmp.eq.s32.totalorder %s16, 0
    %p43 = por %p41, %p42
    %s45 = sadd.s32 %s44, 1
    %p48 = scmp.eq.s32.totalorder %s10, 1
    %p49 = scmp.ne.s32.totalorder %s44, %s46
    %p50 = scmp.eq.s32.totalorder %s10, 0
    %p51 = por %p49, %p50
    %p52 = scmp.ne.s32.totalorder %s44, %s46
    %p53 = scmp.eq.s32.totalorder %s15, 1
    %p54 = por %p52, %p53
    %p55 = scmp.ne.s32.totalorder %s46, %s47
    %p56 = scmp.eq.s32.totalorder %s15, 0
    %p57 = por %p55, %p56
    %p58 = scmp.ne.s32.totalorder %s46, %s47
    %p59 = scmp.eq.s32.totalorder %s16, 1
    %p60 = por %p58, %p59
    %p62 = scmp.ne.s32.totalorder %s47, %s61
    %p63 = scmp.eq.s32.totalorder %s16, 0
    %p64 = por %p62, %p63
    %s66 = sadd.s32 %s65, 1
    %p69 = scmp.eq.s32.totalorder %s10, 1
    %p70 = scmp.ne.s32.totalorder %s65, %s67
    %p71 = scmp.eq.s32.totalorder %s10, 0
    %p72 = por %p70, %p71
    %p73 = scmp.ne.s32.totalorder %s65, %s67
    %p74 = scmp.eq.s32.totalorder %s15, 1
    %p75 = por %p73, %p74
    %p76 = scmp.ne.s32.totalorder %s67, %s68
    %p77 = scmp.eq.s32.totalorder %s15, 0
    %p78 = por %p76, %p77
    %p79 = scmp.ne.s32.totalorder %s67, %s68
    %p80 = scmp.eq.s32.totalorder %s16, 1
    %p81 = por %p79, %p80
    %p83 = scmp.ne.s32.totalorder %s68, %s82
    %p84 = scmp.eq.s32.totalorder %s16, 0
    %p85 = por %p83, %p84
    %s87 = sadd.s32 %s86, 1
    %p90 = scmp.eq.s32.totalorder %s10, 1
    %p91 = scmp.ne.s32.totalorder %s86, %s88
    %p92 = scmp.eq.s32.totalorder %s10, 0
    %p93 = por %p91, %p92
    %p94 = scmp.ne.s32.totalorder %s86, %s88
    %p95 = scmp.eq.s32.totalorder %s15, 1
    %p96 = por %p94, %p95
    %p97 = scmp.ne.s32.totalorder %s88, %s89
    %p98 = scmp.eq.s32.totalorder %s15, 0
    %p99 = por %p97, %p98
    %p100 = scmp.ne.s32.totalorder %s88, %s89
    %p101 = scmp.eq.s32.totalorder %s16, 1
    %p102 = por %p100, %p101
    %p104 = scmp.ne.s32.totalorder %s89, %s103
    %p105 = scmp.eq.s32.totalorder %s16, 0
    %p106 = por %p104, %p105
    %s107 = ssub.s32 %s10, %s17
    %p108 = scmp.eq.s32.totalorder %s107, 0
    %s110 = sadd.s32 %s109, 1
    %s111 = scalar_select %p108, %s109, %s110
    %p114 = pneg %p108
    %p115 = scmp.eq.s32.totalorder %s10, 1
    %p116 = por %p114, %p115
    %p117 = scmp.ne.s32.totalorder %s109, %s112
    %p118 = scmp.eq.s32.totalorder %s10, 0
    %p119 = por %p117, %p118
    %p120 = scmp.ne.s32.totalorder %s109, %s112
    %p121 = scmp.eq.s32.totalorder %s15, 1
    %p122 = por %p120, %p121
    %p123 = scmp.ne.s32.totalorder %s112, %s113
    %p124 = scmp.eq.s32.totalorder %s15, 0
    %p125 = por %p123, %p124
    %p126 = scmp.ne.s32.totalorder %s112, %s113
    %p127 = scmp.eq.s32.totalorder %s16, 1
    %p128 = por %p126, %p127
    %p130 = scmp.ne.s32.totalorder %s113, %s129
    %p131 = scmp.eq.s32.totalorder %s16, 0
    %p132 = por %p130, %p131
    %p133 = scmp.le.s32.totalorder 1, %s10
    %p134 = scmp.lt.s32.totalorder %s10, 3
    %p135 = pnand %p133, %p134
    %p136 = pneg %p135
    // Predicated region
    $region9: #{tpu_custom_call.1} parent=5 // pred_check
      _
    $region10: #{tpu_custom_call.1} parent=5 // pred_check_branch
      %138 = sbr.rel (%p135) target = $region12
    $region11: #{tpu_custom_call.1} parent=5 // pred_region
      %s139 = ssub.s32 %s10, 1
      // Predicated region
      $region13: #{tpu_custom_call.1} parent=11 // pred_check
        %p140 = pneg %p57
      $region14: #{tpu_custom_call.1} parent=11 // pred_check_branch
        %142 = sbr.rel (%p140) target = $region16
      $region15: #{tpu_custom_call.1} parent=11 // pred_region
        _
      $region16: #{tpu_custom_call.1} parent=11 // pred_fallthru
        _
      // Predicated region
      $region17: #{tpu_custom_call.1} parent=11 // pred_check
        %p143 = pneg %p78
      $region18: #{tpu_custom_call.1} parent=11 // pred_check_branch
        %145 = sbr.rel (%p143) target = $region20
      $region19: #{tpu_custom_call.1} parent=11 // pred_region
        _
      $region20: #{tpu_custom_call.1} parent=11 // pred_fallthru
        _
      // Predicated region
      $region21: #{tpu_custom_call.1} parent=11 // pred_check
        %p146 = pneg %p99
      $region22: #{tpu_custom_call.1} parent=11 // pred_check_branch
        %148 = sbr.rel (%p146) target = $region24
      $region23: #{tpu_custom_call.1} parent=11 // pred_region
        _
      $region24: #{tpu_custom_call.1} parent=11 // pred_fallthru
        _
    $region12: #{tpu_custom_call.1} parent=5 // pred_fallthru
      _
    %p149 = scmp.lt.s32.totalorder %s10, 2
    // Predicated region
    $region25: #{tpu_custom_call.1} parent=5 // pred_check
      %p150 = pneg %p149
    $region26: #{tpu_custom_call.1} parent=5 // pred_check_branch
      %152 = sbr.rel (%p150) target = $region28
    $region27: #{tpu_custom_call.1} parent=5 // pred_region
      // Predicated region
      $region29: #{tpu_custom_call.1} parent=27 // pred_check
        %p153 = pneg %p30
      $region30: #{tpu_custom_call.1} parent=27 // pred_check_branch
        %155 = sbr.rel (%p153) target = $region32
      $region31: #{tpu_custom_call.1} parent=27 // pred_region
        %s156 = smul.u32 2, %s10
        %p157 = scmp.lt.s32.totalorder %s156, 3
        %s158 = scalar_select %p157, %s156, 3
        %s159 = smul.addr %s158, 4
        %s160 = scalar_lea.vmem %s0, %s159
        %s161 = smul.u32 2, %s10
      $region32: #{tpu_custom_call.1} parent=27 // pred_fallthru
        _
    $region28: #{tpu_custom_call.1} parent=5 // pred_fallthru
      _
    %p162 = scmp.le.s32.totalorder 1, %s10
    %p163 = scmp.lt.s32.totalorder %s10, 3
    %p164 = pnand %p162, %p163
    %p165 = pneg %p164
    // Predicated region
    $region33: #{tpu_custom_call.1} parent=5 // pred_check
      _
    $region34: #{tpu_custom_call.1} parent=5 // pred_check_branch
      %167 = sbr.rel (%p164) target = $region36
    $region35: #{tpu_custom_call.1} parent=5 // pred_region
      %s168 = ssub.s32 %s10, 1
      %s169 = smul.u32 2, %s15
      %p170 = scmp.lt.s32.totalorder %s169, 3
      %s171 = scalar_select %p170, %s169, 3
      %s172 = smul.addr %s171, 4
      %s173 = scalar_lea.vmem %s0, %s172
      %p174 = pneg %p36
      %p175 = pneg %p33
      %p176 = pneg %p57
      %p177 = pneg %p54
      %p178 = pneg %p78
      %p179 = pneg %p75
      %p180 = pneg %p99
      %p181 = pneg %p96
      %p182 = pneg %p125
      %p183 = pneg %p122
      %s184 = smul.u32 2, %s15
      %p185 = scmp.lt.s32.totalorder %s184, 3
      %s186 = scalar_select %p185, %s184, 3
      %s187 = smul.addr %s186, 8
      %s188 = scalar_lea.vmem %s4, %s187
      %s189 = smul.u32 2, %s15
      %p190 = scmp.lt.s32.totalorder %s189, 3
      %s191 = scalar_select %p190, %s189, 3
      %s192 = smul.addr %s191, 4
      %s193 = scalar_lea.vmem %s0, %s192
      %s194 = smul.u32 2, %s15
      %s195 = smul.u32 2, %s15
      %p196 = scmp.lt.s32.totalorder %s195, 3
      %s197 = scalar_select %p196, %s195, 3
      %s198 = smul.addr %s197, 8
      %s199 = scalar_lea.vmem %s4, %s198
      %s200 = smul.u32 2, %s15
      %v202 = vld [vmem:[%s193] sm:$0xf]
      %v203 = vld [vmem:[%s193 + $0x4] sm:$0xf]
      %v204 = vld [vmem:[%s1] sm:$0xf]
      %v205 = vld [vmem:[%s1 + $0x4] sm:$0xf]
      %v206 = vld [vmem:[%s1 + $0x8] sm:$0xf]
      %v207 = vld [vmem:[%s1 + $0xc] sm:$0xf]
      %v208 = vld [vmem:[%s1 + $0x10] sm:$0xf]
      %v209 = vld [vmem:[%s1 + $0x14] sm:$0xf]
      %v210 = vld [vmem:[%s1 + $0x18] sm:$0xf]
      %v211 = vld [vmem:[%s1 + $0x1c] sm:$0xf]
      %v212 = vld [vmem:[%s1 + $0x20] sm:$0xf]
      %v213 = vld [vmem:[%s1 + $0x24] sm:$0xf]
      %v214 = vld [vmem:[%s1 + $0x28] sm:$0xf]
      %v215 = vld [vmem:[%s1 + $0x2c] sm:$0xf]
      %v216 = vld [vmem:[%s1 + $0x30] sm:$0xf]
      %v217 = vld [vmem:[%s1 + $0x34] sm:$0xf]
      %v218 = vld [vmem:[%s1 + $0x38] sm:$0xf]
      %v219 = vld [vmem:[%s1 + $0x3c] sm:$0xf]
      %v222 = vunpack.c.l.b16 %v202
      %v223 = vunpack.c.l.b16 %v203
      %v224 = vpack.c.b16 %v223, %v222
      %v242 = vunpack.c.l.b16 %v204
      %v243 = vunpack.c.l.b16 %v205
      %v244 = vunpack.c.l.b16 %v206
      %v245 = vunpack.c.l.b16 %v207
      %v246 = vunpack.c.l.b16 %v208
      %v247 = vunpack.c.l.b16 %v209
      %v248 = vunpack.c.l.b16 %v210
      %v249 = vunpack.c.l.b16 %v211
      %v250 = vunpack.c.l.b16 %v212
      %v251 = vunpack.c.l.b16 %v213
      %v252 = vunpack.c.l.b16 %v214
      %v253 = vunpack.c.l.b16 %v215
      %v254 = vunpack.c.l.b16 %v216
      %v255 = vunpack.c.l.b16 %v217
      %v256 = vunpack.c.l.b16 %v218
      %v257 = vunpack.c.l.b16 %v219
      %v258 = vpack.c.b16 %v243, %v242
      %v259 = vpack.c.b16 %v245, %v244
      %v260 = vpack.c.b16 %v247, %v246
      %v261 = vpack.c.b16 %v249, %v248
      %v262 = vpack.c.b16 %v251, %v250
      %v263 = vpack.c.b16 %v253, %v252
      %v264 = vpack.c.b16 %v255, %v254
      %v265 = vpack.c.b16 %v257, %v256
      %274 = vmatprep.subr.bf16.mxu0 0
      %275 = vmatpush1.bf16.msra.mxu0 %v258
      %276 = vmatprep.subr.bf16.mxu0 0
      %277 = vmatpush1.bf16.msra.mxu0 %v259
      %278 = vmatprep.subr.bf16.mxu0 0
      %279 = vmatpush1.bf16.msra.mxu0 %v260
      %280 = vmatprep.subr.bf16.mxu0 0
      %281 = vmatpush1.bf16.msra.mxu0 %v261
      %282 = vmatprep.subr.bf16.mxu0 0
      %283 = vmatpush1.bf16.msra.mxu0 %v262
      %284 = vmatprep.subr.bf16.mxu0 0
      %285 = vmatpush1.bf16.msra.mxu0 %v263
      %286 = vmatprep.subr.bf16.mxu0 0
      %287 = vmatpush1.bf16.msra.mxu0 %v264
      %288 = vmatprep.subr.bf16.mxu0 0
      %289 = vmatpush1.bf16.msra.mxu0 %v265
      %290 = vmatprep.subr.bf16.mxu0 0
      %291 = vmatpush1.bf16.msra.mxu0 0
      %292 = vmatprep.subr.bf16.mxu0 0
      %293 = vmatpush1.bf16.msra.mxu0 0
      %294 = vmatprep.subr.bf16.mxu0 0
      %295 = vmatpush1.bf16.msra.mxu0 0
      %296 = vmatprep.subr.bf16.mxu0 0
      %297 = vmatpush1.bf16.msra.mxu0 0
      %298 = vmatprep.subr.bf16.mxu0 0
      %299 = vmatpush1.bf16.msra.mxu0 0
      %300 = vmatprep.subr.bf16.mxu0 0
      %301 = vmatpush1.bf16.msra.mxu0 0
      %302 = vmatprep.subr.bf16.mxu0 0
      %303 = vmatpush1.bf16.msra.mxu0 0
      %304 = vmatprep.subr.bf16.mxu0 0
      %305 = vmatpush1.bf16.msra.mxu0 0
      %306 = vmatprep.mubr.bf16.mxu0 0
      %307 = vmatmul.mubr.bf16.gmra.mrb[0].mxu0 %v224
      %v308 = vpop.f32.mrb[0].mxu0
      %v309 = vadd.f32 0.0, %v308
      %v310 = vpop.f32.mrb[0].mxu0
      %v311 = vpop.f32.mrb[0].mxu0
      %v312 = vadd.f32 0.0, %v311
      %v313 = vpop.f32.mrb[0].mxu0
      %314 = vdwg.mxu0
      %v315 = vmax.f32 %v309, 0.0
      %v316 = vmax.f32 %v312, 0.0
      %v317 = vmin.f32 %v315, 1.0
      %v318 = vmin.f32 %v316, 1.0
      %v319 = vld [vmem:[%s2] sm:$0xff]
      %v320 = vld [vmem:[%s2 + $0x8] sm:$0xff]
      %v321 = vld [vmem:[%s2 + $0x10] sm:$0xff]
      %v322 = vld [vmem:[%s2 + $0x18] sm:$0xff]
      %v323 = vld [vmem:[%s2 + $0x20] sm:$0xff]
      %v324 = vld [vmem:[%s2 + $0x28] sm:$0xff]
      %v325 = vld [vmem:[%s2 + $0x30] sm:$0xff]
      %v326 = vld [vmem:[%s2 + $0x38] sm:$0xff]
      %v327 = vlaneseq
      %v328 = vand.u32 %v327, 127
      %vm329 = vcmp.lt.s32.totalorder %v328, 0
      %v330 = vsub.s32 0, %v328
      %v331 = vsel %vm329, %v330, %v328
      %v332 = vshrl.u32 %v331, 3
      %v333 = vand.u32 %v331, 7
      %v334 = vsub.s32 0, %v333
      %v335 = vsel %vm329, %v334, %v333
      %vm336 = vcmp.ne.s32.totalorder %v335, 0
      %vm337 = vcmp.lt.s32.totalorder %v335, 0
      %vm338 = vmand %vm337, %vm336
      %v339 = vadd.s32 %v335, 8
      %v340 = vsel %vm338, %v339, %v335
      %v341 = vcvt.s32.f32 %v340
      %v342 = vsub.f32 0.0, %v341
      %vm343 = vcmask 523264
      %v345 = vsel %vm343, %v317, 0
      %v348 = vsel %vm343, %v318, 0
      %350 = vmatprep.subr.mxu0 0.0
      %351 = vmatpush1.msra.mxu0 %v319
      %352 = vmatprep.subr.mxu0 0.0
      %353 = vmatpush1.msra.mxu0 %v320
      %354 = vmatprep.subr.mxu0 0.0
      %355 = vmatpush1.msra.mxu0 %v321
      %356 = vmatprep.subr.mxu0 0.0
      %357 = vmatpush1.msra.mxu0 %v322
      %358 = vmatprep.subr.mxu0 0.0
      %359 = vmatpush1.msra.mxu0 %v323
      %360 = vmatprep.subr.mxu0 0.0
      %361 = vmatpush1.msra.mxu0 %v324
      %362 = vmatprep.subr.mxu0 0.0
      %363 = vmatpush1.msra.mxu0 %v325
      %364 = vmatprep.subr.mxu0 0.0
      %365 = vmatpush1.msra.mxu0 %v326
      %366 = vmatprep.subr.mxu0 0.0
      %367 = vmatpush1.msra.mxu0 0.0
      %368 = vmatprep.subr.mxu0 0.0
      %369 = vmatpush1.msra.mxu0 0.0
      %370 = vmatprep.subr.mxu0 0.0
      %371 = vmatpush1.msra.mxu0 0.0
      %372 = vmatprep.subr.mxu0 0.0
      %373 = vmatpush1.msra.mxu0 0.0
      %374 = vmatprep.subr.mxu0 0.0
      %375 = vmatpush1.msra.mxu0 0.0
      %376 = vmatprep.subr.mxu0 0.0
      %377 = vmatpush1.msra.mxu0 0.0
      %378 = vmatprep.subr.mxu0 0.0
      %379 = vmatpush1.msra.mxu0 0.0
      %380 = vmatprep.subr.mxu0 0.0
      %381 = vmatpush1.msra.mxu0 0.0
      %382 = vmatprep.subr.mxu0 0.0
      %383 = vmatpush1.msra.mxu0 0.0
      %384 = vmatprep.subr.mxu0 0.0
      %385 = vmatpush1.msra.mxu0 0.0
      %386 = vmatprep.subr.mxu0 0.0
      %387 = vmatpush1.msra.mxu0 0.0
      %388 = vmatprep.subr.mxu0 0.0
      %389 = vmatpush1.msra.mxu0 0.0
      %390 = vmatprep.subr.mxu0 0.0
      %391 = vmatpush1.msra.mxu0 0.0
      %392 = vmatprep.subr.mxu0 0.0
      %393 = vmatpush1.msra.mxu0 0.0
      %394 = vmatprep.subr.mxu0 0.0
      %395 = vmatpush1.msra.mxu0 0.0
      %396 = vmatprep.subr.mxu0 0.0
      %397 = vmatpush1.msra.mxu0 0.0
      %398 = vmatprep.subr.mxu0 0.0
      %399 = vmatpush1.msra.mxu0 0.0
      %400 = vmatprep.subr.mxu0 0.0
      %401 = vmatpush1.msra.mxu0 0.0
      %402 = vmatprep.subr.mxu0 0.0
      %403 = vmatpush1.msra.mxu0 0.0
      %404 = vmatprep.subr.mxu0 0.0
      %405 = vmatpush1.msra.mxu0 0.0
      %406 = vmatprep.subr.mxu0 0.0
      %407 = vmatpush1.msra.mxu0 0.0
      %408 = vmatprep.subr.mxu0 0.0
      %409 = vmatpush1.msra.mxu0 0.0
      %410 = vmatprep.subr.mxu0 0.0
      %411 = vmatpush1.msra.mxu0 0.0
      %412 = vmatprep.subr.mxu0 0.0
      %413 = vmatpush1.msra.mxu0 0.0
      %414 = vmatprep.mubr.f32.mxu0 0.0
      %415 = vmatmul.mubr.f32.gmra.mrb[0].mxu0 %v345
      %v416 = vpop.f32.mrb[0].mxu0
      %v417 = vadd.f32 %v342, %v416
      %v418 = vpop.f32.mrb[0].mxu0
      %419 = vmatprep.mubr.f32.mxu0 0.0
      %420 = vmatmul.mubr.f32.gmra.mrb[0].mxu0 %v348
      %v421 = vpop.f32.mrb[0].mxu0
      %v422 = vadd.f32 %v342, %v421
      %v423 = vpop.f32.mrb[0].mxu0
      %424 = vdwg.mxu0
      %v425 = vmax.f32 %v417, 0.0
      %v426 = vmax.f32 %v422, 0.0
      %v427 = vmin.f32 %v425, 1.0
      %v428 = vmin.f32 %v426, 1.0
      %v429 = vld [vmem:[%s3] sm:$0xff]
      %v430 = vld [vmem:[%s3 + $0x8] sm:$0xff]
      %v431 = vld [vmem:[%s3 + $0x10] sm:$0xff]
      %v432 = vld [vmem:[%s3 + $0x18] sm:$0xff]
      %v433 = vld [vmem:[%s3 + $0x20] sm:$0xff]
      %v434 = vld [vmem:[%s3 + $0x28] sm:$0xff]
      %v435 = vld [vmem:[%s3 + $0x30] sm:$0xff]
      %v436 = vld [vmem:[%s3 + $0x38] sm:$0xff]
      %v438 = vsel %vm343, %v427, 0
      %v441 = vsel %vm343, %v428, 0
      %443 = vmatprep.subr.mxu0 0.0
      %444 = vmatpush1.msra.mxu0 %v429
      %445 = vmatprep.subr.mxu0 0.0
      %446 = vmatpush1.msra.mxu0 %v430
      %447 = vmatprep.subr.mxu0 0.0
      %448 = vmatpush1.msra.mxu0 %v431
      %449 = vmatprep.subr.mxu0 0.0
      %450 = vmatpush1.msra.mxu0 %v432
      %451 = vmatprep.subr.mxu0 0.0
      %452 = vmatpush1.msra.mxu0 %v433
      %453 = vmatprep.subr.mxu0 0.0
      %454 = vmatpush1.msra.mxu0 %v434
      %455 = vmatprep.subr.mxu0 0.0
      %456 = vmatpush1.msra.mxu0 %v435
      %457 = vmatprep.subr.mxu0 0.0
      %458 = vmatpush1.msra.mxu0 %v436
      %459 = vmatprep.subr.mxu0 0.0
      %460 = vmatpush1.msra.mxu0 0.0
      %461 = vmatprep.subr.mxu0 0.0
      %462 = vmatpush1.msra.mxu0 0.0
      %463 = vmatprep.subr.mxu0 0.0
      %464 = vmatpush1.msra.mxu0 0.0
      %465 = vmatprep.subr.mxu0 0.0
      %466 = vmatpush1.msra.mxu0 0.0
      %467 = vmatprep.subr.mxu0 0.0
      %468 = vmatpush1.msra.mxu0 0.0
      %469 = vmatprep.subr.mxu0 0.0
      %470 = vmatpush1.msra.mxu0 0.0
      %471 = vmatprep.subr.mxu0 0.0
      %472 = vmatpush1.msra.mxu0 0.0
      %473 = vmatprep.subr.mxu0 0.0
      %474 = vmatpush1.msra.mxu0 0.0
      %475 = vmatprep.subr.mxu0 0.0
      %476 = vmatpush1.msra.mxu0 0.0
      %477 = vmatprep.subr.mxu0 0.0
      %478 = vmatpush1.msra.mxu0 0.0
      %479 = vmatprep.subr.mxu0 0.0
      %480 = vmatpush1.msra.mxu0 0.0
      %481 = vmatprep.subr.mxu0 0.0
      %482 = vmatpush1.msra.mxu0 0.0
      %483 = vmatprep.subr.mxu0 0.0
      %484 = vmatpush1.msra.mxu0 0.0
      %485 = vmatprep.subr.mxu0 0.0
      %486 = vmatpush1.msra.mxu0 0.0
      %487 = vmatprep.subr.mxu0 0.0
      %488 = vmatpush1.msra.mxu0 0.0
      %489 = vmatprep.subr.mxu0 0.0
      %490 = vmatpush1.msra.mxu0 0.0
      %491 = vmatprep.subr.mxu0 0.0
      %492 = vmatpush1.msra.mxu0 0.0
      %493 = vmatprep.subr.mxu0 0.0
      %494 = vmatpush1.msra.mxu0 0.0
      %495 = vmatprep.subr.mxu0 0.0
      %496 = vmatpush1.msra.mxu0 0.0
      %497 = vmatprep.subr.mxu0 0.0
      %498 = vmatpush1.msra.mxu0 0.0
      %499 = vmatprep.subr.mxu0 0.0
      %500 = vmatpush1.msra.mxu0 0.0
      %501 = vmatprep.subr.mxu0 0.0
      %502 = vmatpush1.msra.mxu0 0.0
      %503 = vmatprep.subr.mxu0 0.0
      %504 = vmatpush1.msra.mxu0 0.0
      %505 = vmatprep.subr.mxu0 0.0
      %506 = vmatpush1.msra.mxu0 0.0
      %507 = vmatprep.mubr.f32.mxu0 0.0
      %508 = vmatmul.mubr.f32.gmra.mrb[0].mxu0 %v438
      %v509 = vpop.f32.mrb[0].mxu0
      %v510 = vadd.f32 0.0, %v509
      %v511 = vpop.f32.mrb[0].mxu0
      %512 = vmatprep.mubr.f32.mxu0 0.0
      %513 = vmatmul.mubr.f32.gmra.mrb[0].mxu0 %v441
      %v514 = vpop.f32.mrb[0].mxu0
      %v515 = vadd.f32 0.0, %v514
      %v516 = vpop.f32.mrb[0].mxu0
      %517 = vdwg.mxu0
      %vm518 = vcmask 64512
      %519 = vst.msk [vmem:[%s199] sm:$0xff] %vm518, %v510
      %520 = vst.msk [vmem:[%s199 + $0x8] sm:$0xff] %vm518, %v515
      %s521 = smul.u32 2, %s15
      %p522 = scmp.lt.s32.totalorder %s521, 3
      %s523 = scalar_select %p522, %s521, 3
      %s524 = smul.addr %s523, 8
      %s525 = scalar_lea.vmem %s4, %s524
      // Predicated region
      $region37: #{tpu_custom_call.1} parent=35 // pred_check
        %p526 = pneg %p122
      $region38: #{tpu_custom_call.1} parent=35 // pred_check_branch
        %528 = sbr.rel (%p526) target = $region40
      $region39: #{tpu_custom_call.1} parent=35 // pred_region
        %s529 = smul.u32 2, %s15
      $region40: #{tpu_custom_call.1} parent=35 // pred_fallthru
        _
    $region36: #{tpu_custom_call.1} parent=5 // pred_fallthru
      _
    %p530 = scmp.le.s32.totalorder 2, %s10
    // Predicated region
    $region41: #{tpu_custom_call.1} parent=5 // pred_check
      %p531 = pneg %p530
    $region42: #{tpu_custom_call.1} parent=5 // pred_check_branch
      %533 = sbr.rel (%p531) target = $region44
    $region43: #{tpu_custom_call.1} parent=5 // pred_region
      %s534 = ssub.s32 %s10, 2
      // Predicated region
      $region45: #{tpu_custom_call.1} parent=43 // pred_check
        %p535 = pneg %p128
      $region46: #{tpu_custom_call.1} parent=43 // pred_check_branch
        %537 = sbr.rel (%p535) target = $region48
      $region47: #{tpu_custom_call.1} parent=43 // pred_region
        %s538 = smul.u32 2, %s16
        %p539 = scmp.lt.s32.totalorder %s538, 3
        %s540 = scalar_select %p539, %s538, 3
        %s541 = smul.addr %s540, 8
        %s542 = scalar_lea.vmem %s4, %s541
      $region48: #{tpu_custom_call.1} parent=43 // pred_fallthru
        _
    $region44: #{tpu_custom_call.1} parent=5 // pred_fallthru
      _
  $region6: #{tpu_custom_call.1} parent=0 // loop_footer
    %s14 = sadd.s32 1, %s10
  $region7: #{tpu_custom_call.1} parent=0 // loop_footer_branch
    %9 = sbr.rel target = $region3
  $region8: #{tpu_custom_call.1} parent=0 // loop_exit
    _

</llo_original>
